<compile_context>
chip_gen: v6e
topology: v6e:2x2x1
jax: 0.10.0
libtpu: 0.0.40
codegen_flags: <defaults>
</compile_context>

<pallas_src>
import jax
import jax.numpy as jnp
from jax.experimental import pallas as pl
from jax.experimental.pallas import tpu as pltpu

TILE_S = 256                                  # gathered rows per grid step (multiple of 8)
MIN_PALLAS_ROWS = 64                          # below this, XLA's gather beats launch overhead
MAX_RESIDENT_TABLE_BYTES = 12 * 1024 * 1024   # table must fit VMEM (double-buffered) on v7x


def _round_up(x, m):
    return (x + m - 1) // m * m


def _embedding_gather_kernel(idx_ref, table_ref, out_ref):
    """Gather TILE_S rows of the VMEM-resident table with a one-hot MXU matmul."""
    # idx_ref:   VMEM (TILE_S, 1)        int32 row indices for this tile
    # table_ref: VMEM (num_users, D_pad) full embedding table (grid-invariant)
    # out_ref:   VMEM (TILE_S, D_pad)    gathered output tile (lane-dense)
    tile_s = out_ref.shape[0]
    num_users = table_ref.shape[0]

    idx = idx_ref[...]                                                    # (TILE_S, 1)
    user_ids = jax.lax.broadcasted_iota(jnp.int32, (tile_s, num_users), 1)
    one_hot = (idx == user_ids).astype(table_ref.dtype)                   # (TILE_S, N)

    # out = one_hot @ table : one MXU op + one full-tile (unmasked, lane-dense) store.
    out_ref[...] = jnp.dot(
        one_hot, table_ref[...], preferred_element_type=jnp.float32
    ).astype(out_ref.dtype)


@jax.jit
def user_embeddings_forward(user_idx, table):
    """Pallas equivalent of UserEmbeddings.forward (embedding row lookup)."""
    num_users, emb_dim = table.shape
    orig_shape = user_idx.shape

    # nn.Embedding raises on out-of-range indices; Pallas VMEM accesses are unchecked,
    # so clip defensively instead of silently reading adjacent VMEM.
    flat_idx = jnp.clip(user_idx.reshape(-1).astype(jnp.int32), 0, num_users - 1)
    s = flat_idx.shape[0]

    itemsize = jnp.dtype(table.dtype).itemsize
    d_pad = _round_up(emb_dim, 128)               # lane-dense output stores
    table_bytes = num_users * d_pad * itemsize

    # Fallbacks: tiny lookups (pure launch overhead) or tables too big for VMEM residency.
    if s < MIN_PALLAS_ROWS or table_bytes > MAX_RESIDENT_TABLE_BYTES:
        return table[flat_idx].reshape(orig_shape + (emb_dim,))

    table_p = table
    if d_pad != emb_dim:
        table_p = jnp.pad(table, ((0, 0), (0, d_pad - emb_dim)))

    s_pad = _round_up(s, TILE_S)
    flat_idx = jnp.pad(flat_idx, (0, s_pad - s))  # padded rows gather index 0, dropped below
    idx2d = flat_idx.reshape(s_pad, 1)

    grid_spec = pltpu.PrefetchScalarGridSpec(
        num_scalar_prefetch=0,
        grid=(s_pad // TILE_S,),
        in_specs=[
            pl.BlockSpec((TILE_S, 1), lambda i: (i, 0)),           # index tile
            pl.BlockSpec((num_users, d_pad), lambda i: (0, 0)),    # resident table
        ],
        out_specs=pl.BlockSpec((TILE_S, d_pad), lambda i: (i, 0)),
    )

    out = pl.pallas_call(
        _embedding_gather_kernel,
        out_shape=jax.ShapeDtypeStruct((s_pad, d_pad), table.dtype),
        grid_spec=grid_spec,
        compiler_params=pltpu.CompilerParams(
            dimension_semantics=("parallel",),     # disjoint output tiles -> megacore OK
            vmem_limit_bytes=48 * 1024 * 1024,     # explicit budget, fits v7x's 64 MiB VMEM
        ),
    )(idx2d, table_p)

    return out[:s, :emb_dim].reshape(orig_shape + (emb_dim,))


if __name__ == "__main__":
    num_users = 64
    embedding_dim = 128
    batch, seq = 4, 64            # 256 lookups -> exercises the Pallas path

    key = jax.random.PRNGKey(0)
    k_table, k_idx = jax.random.split(key)

    # Deterministic "parameters". Values are rounded to bf16-representable f32 so the
    # one-hot MXU gather is bit-exact regardless of the matmul's internal bf16 passes.
    table = jax.random.normal(k_table, (num_users, embedding_dim), dtype=jnp.float32)
    table = table.astype(jnp.bfloat16).astype(jnp.float32)
    user_idx = jax.random.randint(k_idx, (batch, seq), 0, num_users, dtype=jnp.int32)

    out = jax.block_until_ready(user_embeddings_forward(user_idx, table))

    ref = table[user_idx]         # reference: exact nn.Embedding semantics
    assert out.shape == (batch, seq, embedding_dim), out.shape
    assert jnp.allclose(out, ref, atol=1e-6, rtol=1e-6), "mismatch vs reference gather"

    print("KERNEL_OK")
</pallas_src>

<mosaic_0001>
module attributes {stable_mosaic.version = 11 : i64} {
  func.func @_embedding_gather_kernel(%arg0: i32, %arg1: memref<256x1xi32, #tpu.memory_space<vmem>>, %arg2: memref<64x128xf32, #tpu.memory_space<vmem>>, %arg3: memref<256x128xf32, #tpu.memory_space<vmem>>) attributes {dimension_semantics = [#tpu.dimension_semantics<parallel>], iteration_bounds = array<i64: 1>, scalar_prefetch = 0 : i64, scratch_operands = 0 : i64, tpu.core_type = #tpu.core_type<tc>, window_params = [{transform_indices = @transform_0, window_bounds = array<i64: 256, 1>}, {pipeline_mode = #tpu.pipeline_mode<synchronous>, transform_indices = @transform_1, window_bounds = array<i64: 64, 128>}, {transform_indices = @transform_2, window_bounds = array<i64: 256, 128>}]} {
    %c0 = arith.constant 0 : index
    %c0_0 = arith.constant 0 : index
    %0 = vector.load %arg1[%c0, %c0_0] : memref<256x1xi32, #tpu.memory_space<vmem>>, vector<256x1xi32>
    %1 = tpu.iota {dimensions = array<i32: 1>} : vector<256x64xi32>
    %2 = vector.broadcast %0 : vector<256x1xi32> to vector<256x64xi32>
    %3 = arith.cmpi eq, %2, %1 : vector<256x64xi32>
    %4 = arith.extui %3 : vector<256x64xi1> to vector<256x64xi32>
    %5 = arith.sitofp %4 : vector<256x64xi32> to vector<256x64xf32>
    %c0_1 = arith.constant 0 : index
    %c0_2 = arith.constant 0 : index
    %6 = vector.load %arg2[%c0_1, %c0_2] : memref<64x128xf32, #tpu.memory_space<vmem>>, vector<64x128xf32>
    %cst = arith.constant dense<0.000000e+00> : vector<256x128xf32>
    %7 = tpu.matmul %5, %6, %cst {dimension_numbers = #tpu.dot_dimension_numbers<[1], [0], [0], [1], [0, 0, 1, 1], [], []>} : vector<256x64xf32>, vector<64x128xf32>, vector<256x128xf32> -> vector<256x128xf32>
    %c0_3 = arith.constant 0 : index
    %c0_4 = arith.constant 0 : index
    %8 = vector.load %arg3[%c0_3, %c0_4] : memref<256x128xf32, #tpu.memory_space<vmem>>, vector<256x128xf32>
    tpu.vector_store %arg3[%c0_3, %c0_4], %7 {strides = array<i32>} : memref<256x128xf32, #tpu.memory_space<vmem>>, vector<256x128xf32>,
    return
  }
  func.func @transform_0(%arg0: i32) -> (i32, i32) {
    %c0_i32 = arith.constant 0 : i32
    %c0_i32_0 = arith.constant 0 : i32
    return %arg0, %c0_i32 : i32, i32
  }
  func.func @transform_1(%arg0: i32) -> (i32, i32) {
    %c0_i32 = arith.constant 0 : i32
    %c0_i32_0 = arith.constant 0 : i32
    %c0_i32_1 = arith.constant 0 : i32
    return %c0_i32, %c0_i32_0 : i32, i32
  }
  func.func @transform_2(%arg0: i32) -> (i32, i32) {
    %c0_i32 = arith.constant 0 : i32
    %c0_i32_0 = arith.constant 0 : i32
    return %arg0, %c0_i32 : i32, i32
  }
}

</mosaic_0001>

<llo_original>
// kernel: user_embeddings_forward.1
$region0: #{user_embeddings_forward.1}
  #allocation0 [shape = 'u32[]', space=smem, size = 0x4, offset = 0x4, fixed_abs, tag = 'smem constant byte address 0x4 - core index']
  #allocation1 [shape = 'u32[144,128]{1,0:T(1,128)}', space=vmem, size = 0x12000, scoped, tag = 'internal scratch']
  %s0 = inlined_call_operand.vmem [shape: s32[256,1], index: 0, kind: input, shape index: {}]
  %s1 = inlined_call_operand.vmem [shape: f32[64,128], index: 1, kind: input, shape index: {}]
  %s2 = inlined_call_operand.hbm [shape: f32[256,128], index: 2, kind: output, shape index: {}]
  %s3 = sld [smem:[#allocation0]]
  $region18: #{user_embeddings_forward.1} parent=0
    _
  %s5 = ssub.s32 1, %s3
  %s6 = scalar_select 0, %s5, %s3
  $region1: #{user_embeddings_forward.1} parent=0
    #allocation2 [shape = 'u8[131072]{0}', space=vmem, size = 0x20000, scoped, tag = 'output window, operand 0, single buffered']
    #allocation3 [shape = 's32[1]{0}', space=sflag, size = 0x4, scoped, tag = 'scoped memory for user_embeddings_forward.1']
    %7 = vsyncpa [#allocation3], 0
    // Predicated region
    $region2: #{user_embeddings_forward.1} parent=1 // pred_check
      _
    $region3: #{user_embeddings_forward.1} parent=1 // pred_check_branch
      %9 = sbr.rel (0) target = $region5
    $region4: #{user_embeddings_forward.1} parent=1 // pred_region
      _
    $region5: #{user_embeddings_forward.1} parent=1 // pred_fallthru
      _
    // Predicated region
    $region6: #{user_embeddings_forward.1} parent=1 // pred_check
      _
    $region7: #{user_embeddings_forward.1} parent=1 // pred_check_branch
      %11 = sbr.rel (0) target = $region9
    $region8: #{user_embeddings_forward.1} parent=1 // pred_region
      _
    $region9: #{user_embeddings_forward.1} parent=1 // pred_fallthru
      _
    %v12 = vld [vmem:[%s0] sm:$0xff]
    %v13 = vld [vmem:[%s0 + $0x8] sm:$0xff]
    %v14 = vld [vmem:[%s0 + $0x10] sm:$0xff]
    %v15 = vld [vmem:[%s0 + $0x18] sm:$0xff]
    %v16 = vld [vmem:[%s0 + $0x20] sm:$0xff]
    %v17 = vld [vmem:[%s0 + $0x28] sm:$0xff]
    %v18 = vld [vmem:[%s0 + $0x30] sm:$0xff]
    %v19 = vld [vmem:[%s0 + $0x38] sm:$0xff]
    %v20 = vld [vmem:[%s0 + $0x40] sm:$0xff]
    %v21 = vld [vmem:[%s0 + $0x48] sm:$0xff]
    %v22 = vld [vmem:[%s0 + $0x50] sm:$0xff]
    %v23 = vld [vmem:[%s0 + $0x58] sm:$0xff]
    %v24 = vld [vmem:[%s0 + $0x60] sm:$0xff]
    %v25 = vld [vmem:[%s0 + $0x68] sm:$0xff]
    %v26 = vld [vmem:[%s0 + $0x70] sm:$0xff]
    %v27 = vld [vmem:[%s0 + $0x78] sm:$0xff]
    %v28 = vld [vmem:[%s0 + $0x80] sm:$0xff]
    %v29 = vld [vmem:[%s0 + $0x88] sm:$0xff]
    %v30 = vld [vmem:[%s0 + $0x90] sm:$0xff]
    %v31 = vld [vmem:[%s0 + $0x98] sm:$0xff]
    %v32 = vld [vmem:[%s0 + $0xa0] sm:$0xff]
    %v33 = vld [vmem:[%s0 + $0xa8] sm:$0xff]
    %v34 = vld [vmem:[%s0 + $0xb0] sm:$0xff]
    %v35 = vld [vmem:[%s0 + $0xb8] sm:$0xff]
    %v36 = vld [vmem:[%s0 + $0xc0] sm:$0xff]
    %v37 = vld [vmem:[%s0 + $0xc8] sm:$0xff]
    %v38 = vld [vmem:[%s0 + $0xd0] sm:$0xff]
    %v39 = vld [vmem:[%s0 + $0xd8] sm:$0xff]
    %v40 = vld [vmem:[%s0 + $0xe0] sm:$0xff]
    %v41 = vld [vmem:[%s0 + $0xe8] sm:$0xff]
    %v42 = vld [vmem:[%s0 + $0xf0] sm:$0xff]
    %v43 = vld [vmem:[%s0 + $0xf8] sm:$0xff]
    %v44 = vlaneseq
    %v45 = vand.u32 %v44, 127
    %46 = vset.pattern.permute.xlu0 0
    %47 = vperm.xlu0 %46, %v12
    %v48 = vpop.permute.xlu0 %47
    %49 = vset.pattern.permute.xlu0 0
    %50 = vperm.xlu0 %49, %v13
    %v51 = vpop.permute.xlu0 %50
    %52 = vset.pattern.permute.xlu0 0
    %53 = vperm.xlu0 %52, %v14
    %v54 = vpop.permute.xlu0 %53
    %55 = vset.pattern.permute.xlu0 0
    %56 = vperm.xlu0 %55, %v15
    %v57 = vpop.permute.xlu0 %56
    %58 = vset.pattern.permute.xlu0 0
    %59 = vperm.xlu0 %58, %v16
    %v60 = vpop.permute.xlu0 %59
    %61 = vset.pattern.permute.xlu0 0
    %62 = vperm.xlu0 %61, %v17
    %v63 = vpop.permute.xlu0 %62
    %64 = vset.pattern.permute.xlu0 0
    %65 = vperm.xlu0 %64, %v18
    %v66 = vpop.permute.xlu0 %65
    %67 = vset.pattern.permute.xlu0 0
    %68 = vperm.xlu0 %67, %v19
    %v69 = vpop.permute.xlu0 %68
    %70 = vset.pattern.permute.xlu0 0
    %71 = vperm.xlu0 %70, %v20
    %v72 = vpop.permute.xlu0 %71
    %73 = vset.pattern.permute.xlu0 0
    %74 = vperm.xlu0 %73, %v21
    %v75 = vpop.permute.xlu0 %74
    %76 = vset.pattern.permute.xlu0 0
    %77 = vperm.xlu0 %76, %v22
    %v78 = vpop.permute.xlu0 %77
    %79 = vset.pattern.permute.xlu0 0
    %80 = vperm.xlu0 %79, %v23
    %v81 = vpop.permute.xlu0 %80
    %82 = vset.pattern.permute.xlu0 0
    %83 = vperm.xlu0 %82, %v24
    %v84 = vpop.permute.xlu0 %83
    %85 = vset.pattern.permute.xlu0 0
    %86 = vperm.xlu0 %85, %v25
    %v87 = vpop.permute.xlu0 %86
    %88 = vset.pattern.permute.xlu0 0
    %89 = vperm.xlu0 %88, %v26
    %v90 = vpop.permute.xlu0 %89
    %91 = vset.pattern.permute.xlu0 0
    %92 = vperm.xlu0 %91, %v27
    %v93 = vpop.permute.xlu0 %92
    %94 = vset.pattern.permute.xlu0 0
    %95 = vperm.xlu0 %94, %v28
    %v96 = vpop.permute.xlu0 %95
    %97 = vset.pattern.permute.xlu0 0
    %98 = vperm.xlu0 %97, %v29
    %v99 = vpop.permute.xlu0 %98
    %100 = vset.pattern.permute.xlu0 0
    %101 = vperm.xlu0 %100, %v30
    %v102 = vpop.permute.xlu0 %101
    %103 = vset.pattern.permute.xlu0 0
    %104 = vperm.xlu0 %103, %v31
    %v105 = vpop.permute.xlu0 %104
    %106 = vset.pattern.permute.xlu0 0
    %107 = vperm.xlu0 %106, %v32
    %v108 = vpop.permute.xlu0 %107
    %109 = vset.pattern.permute.xlu0 0
    %110 = vperm.xlu0 %109, %v33
    %v111 = vpop.permute.xlu0 %110
    %112 = vset.pattern.permute.xlu0 0
    %113 = vperm.xlu0 %112, %v34
    %v114 = vpop.permute.xlu0 %113
    %115 = vset.pattern.permute.xlu0 0
    %116 = vperm.xlu0 %115, %v35
    %v117 = vpop.permute.xlu0 %116
    %118 = vset.pattern.permute.xlu0 0
    %119 = vperm.xlu0 %118, %v36
    %v120 = vpop.permute.xlu0 %119
    %121 = vset.pattern.permute.xlu0 0
    %122 = vperm.xlu0 %121, %v37
    %v123 = vpop.permute.xlu0 %122
    %124 = vset.pattern.permute.xlu0 0
    %125 = vperm.xlu0 %124, %v38
    %v126 = vpop.permute.xlu0 %125
    %127 = vset.pattern.permute.xlu0 0
    %128 = vperm.xlu0 %127, %v39
    %v129 = vpop.permute.xlu0 %128
    %130 = vset.pattern.permute.xlu0 0
    %131 = vperm.xlu0 %130, %v40
    %v132 = vpop.permute.xlu0 %131
    %133 = vset.pattern.permute.xlu0 0
    %134 = vperm.xlu0 %133, %v41
    %v135 = vpop.permute.xlu0 %134
    %136 = vset.pattern.permute.xlu0 0
    %137 = vperm.xlu0 %136, %v42
    %v138 = vpop.permute.xlu0 %137
    %139 = vset.pattern.permute.xlu0 0
    %140 = vperm.xlu0 %139, %v43
    %v141 = vpop.permute.xlu0 %140
    %vm142 = vcmp.eq.s32.totalorder %v48, %v45
    %vm143 = vcmp.eq.s32.totalorder %v51, %v45
    %vm144 = vcmp.eq.s32.totalorder %v54, %v45
    %vm145 = vcmp.eq.s32.totalorder %v57, %v45
    %vm146 = vcmp.eq.s32.totalorder %v60, %v45
    %vm147 = vcmp.eq.s32.totalorder %v63, %v45
    %vm148 = vcmp.eq.s32.totalorder %v66, %v45
    %vm149 = vcmp.eq.s32.totalorder %v69, %v45
    %vm150 = vcmp.eq.s32.totalorder %v72, %v45
    %vm151 = vcmp.eq.s32.totalorder %v75, %v45
    %vm152 = vcmp.eq.s32.totalorder %v78, %v45
    %vm153 = vcmp.eq.s32.totalorder %v81, %v45
    %vm154 = vcmp.eq.s32.totalorder %v84, %v45
    %vm155 = vcmp.eq.s32.totalorder %v87, %v45
    %vm156 = vcmp.eq.s32.totalorder %v90, %v45
    %vm157 = vcmp.eq.s32.totalorder %v93, %v45
    %vm158 = vcmp.eq.s32.totalorder %v96, %v45
    %vm159 = vcmp.eq.s32.totalorder %v99, %v45
    %vm160 = vcmp.eq.s32.totalorder %v102, %v45
    %vm161 = vcmp.eq.s32.totalorder %v105, %v45
    %vm162 = vcmp.eq.s32.totalorder %v108, %v45
    %vm163 = vcmp.eq.s32.totalorder %v111, %v45
    %vm164 = vcmp.eq.s32.totalorder %v114, %v45
    %vm165 = vcmp.eq.s32.totalorder %v117, %v45
    %vm166 = vcmp.eq.s32.totalorder %v120, %v45
    %vm167 = vcmp.eq.s32.totalorder %v123, %v45
    %vm168 = vcmp.eq.s32.totalorder %v126, %v45
    %vm169 = vcmp.eq.s32.totalorder %v129, %v45
    %vm170 = vcmp.eq.s32.totalorder %v132, %v45
    %vm171 = vcmp.eq.s32.totalorder %v135, %v45
    %vm172 = vcmp.eq.s32.totalorder %v138, %v45
    %vm173 = vcmp.eq.s32.totalorder %v141, %v45
    %v174 = vsel %vm142, 1, 0
    %v175 = vsel %vm143, 1, 0
    %v176 = vsel %vm144, 1, 0
    %v177 = vsel %vm145, 1, 0
    %v178 = vsel %vm146, 1, 0
    %v179 = vsel %vm147, 1, 0
    %v180 = vsel %vm148, 1, 0
    %v181 = vsel %vm149, 1, 0
    %v182 = vsel %vm150, 1, 0
    %v183 = vsel %vm151, 1, 0
    %v184 = vsel %vm152, 1, 0
    %v185 = vsel %vm153, 1, 0
    %v186 = vsel %vm154, 1, 0
    %v187 = vsel %vm155, 1, 0
    %v188 = vsel %vm156, 1, 0
    %v189 = vsel %vm157, 1, 0
    %v190 = vsel %vm158, 1, 0
    %v191 = vsel %vm159, 1, 0
    %v192 = vsel %vm160, 1, 0
    %v193 = vsel %vm161, 1, 0
    %v194 = vsel %vm162, 1, 0
    %v195 = vsel %vm163, 1, 0
    %v196 = vsel %vm164, 1, 0
    %v197 = vsel %vm165, 1, 0
    %v198 = vsel %vm166, 1, 0
    %v199 = vsel %vm167, 1, 0
    %v200 = vsel %vm168, 1, 0
    %v201 = vsel %vm169, 1, 0
    %v202 = vsel %vm170, 1, 0
    %v203 = vsel %vm171, 1, 0
    %v204 = vsel %vm172, 1, 0
    %v205 = vsel %vm173, 1, 0
    %v206 = vcvt.s32.f32 %v174
    %v207 = vcvt.s32.f32 %v175
    %v208 = vcvt.s32.f32 %v176
    %v209 = vcvt.s32.f32 %v177
    %v210 = vcvt.s32.f32 %v178
    %v211 = vcvt.s32.f32 %v179
    %v212 = vcvt.s32.f32 %v180
    %v213 = vcvt.s32.f32 %v181
    %v214 = vcvt.s32.f32 %v182
    %v215 = vcvt.s32.f32 %v183
    %v216 = vcvt.s32.f32 %v184
    %v217 = vcvt.s32.f32 %v185
    %v218 = vcvt.s32.f32 %v186
    %v219 = vcvt.s32.f32 %v187
    %v220 = vcvt.s32.f32 %v188
    %v221 = vcvt.s32.f32 %v189
    %v222 = vcvt.s32.f32 %v190
    %v223 = vcvt.s32.f32 %v191
    %v224 = vcvt.s32.f32 %v192
    %v225 = vcvt.s32.f32 %v193
    %v226 = vcvt.s32.f32 %v194
    %v227 = vcvt.s32.f32 %v195
    %v228 = vcvt.s32.f32 %v196
    %v229 = vcvt.s32.f32 %v197
    %v230 = vcvt.s32.f32 %v198
    %v231 = vcvt.s32.f32 %v199
    %v232 = vcvt.s32.f32 %v200
    %v233 = vcvt.s32.f32 %v201
    %v234 = vcvt.s32.f32 %v202
    %v235 = vcvt.s32.f32 %v203
    %v236 = vcvt.s32.f32 %v204
    %v237 = vcvt.s32.f32 %v205
    %v238 = vld [vmem:[%s1] sm:$0xff]
    %v239 = vld [vmem:[%s1 + $0x8] sm:$0xff]
    %v240 = vld [vmem:[%s1 + $0x10] sm:$0xff]
    %v241 = vld [vmem:[%s1 + $0x18] sm:$0xff]
    %v242 = vld [vmem:[%s1 + $0x20] sm:$0xff]
    %v243 = vld [vmem:[%s1 + $0x28] sm:$0xff]
    %v244 = vld [vmem:[%s1 + $0x30] sm:$0xff]
    %v245 = vld [vmem:[%s1 + $0x38] sm:$0xff]
    %vm246 = vcmask 523264
    %v248 = vsel %vm246, %v206, 0
    %v251 = vsel %vm246, %v207, 0
    %v254 = vsel %vm246, %v208, 0
    %v257 = vsel %vm246, %v209, 0
    %v260 = vsel %vm246, %v210, 0
    %v263 = vsel %vm246, %v211, 0
    %v266 = vsel %vm246, %v212, 0
    %v269 = vsel %vm246, %v213, 0
    %v272 = vsel %vm246, %v214, 0
    %v275 = vsel %vm246, %v215, 0
    %v278 = vsel %vm246, %v216, 0
    %v281 = vsel %vm246, %v217, 0
    %v284 = vsel %vm246, %v218, 0
    %v287 = vsel %vm246, %v219, 0
    %v290 = vsel %vm246, %v220, 0
    %v293 = vsel %vm246, %v221, 0
    %v296 = vsel %vm246, %v222, 0
    %v299 = vsel %vm246, %v223, 0
    %v302 = vsel %vm246, %v224, 0
    %v305 = vsel %vm246, %v225, 0
    %v308 = vsel %vm246, %v226, 0
    %v311 = vsel %vm246, %v227, 0
    %v314 = vsel %vm246, %v228, 0
    %v317 = vsel %vm246, %v229, 0
    %v320 = vsel %vm246, %v230, 0
    %v323 = vsel %vm246, %v231, 0
    %v326 = vsel %vm246, %v232, 0
    %v329 = vsel %vm246, %v233, 0
    %v332 = vsel %vm246, %v234, 0
    %v335 = vsel %vm246, %v235, 0
    %v338 = vsel %vm246, %v236, 0
    %v341 = vsel %vm246, %v237, 0
    %343 = vmatprep.subr.mxu0 0.0
    %344 = vmatpush1.msra.mxu0 0.0
    %345 = vmatprep.subr.mxu0 0.0
    %346 = vmatpush1.msra.mxu0 0.0
    %347 = vmatprep.subr.mxu0 0.0
    %348 = vmatpush1.msra.mxu0 0.0
    %349 = vmatprep.subr.mxu0 0.0
    %350 = vmatpush1.msra.mxu0 0.0
    %351 = vmatprep.subr.mxu0 0.0
    %352 = vmatpush1.msra.mxu0 0.0
    %353 = vmatprep.subr.mxu0 0.0
    %354 = vmatpush1.msra.mxu0 0.0
    %355 = vmatprep.subr.mxu0 0.0
    %356 = vmatpush1.msra.mxu0 0.0
    %357 = vmatprep.subr.mxu0 0.0
    %358 = vmatpush1.msra.mxu0 0.0
    %359 = vmatprep.subr.mxu0 0.0
    %360 = vmatpush1.msra.mxu0 %v245
    %361 = vmatprep.subr.mxu0 0.0
    %362 = vmatpush1.msra.mxu0 %v244
    %363 = vmatprep.subr.mxu0 0.0
    %364 = vmatpush1.msra.mxu0 %v243
    %365 = vmatprep.subr.mxu0 0.0
    %366 = vmatpush1.msra.mxu0 %v242
    %367 = vmatprep.subr.mxu0 0.0
    %368 = vmatpush1.msra.mxu0 %v241
    %369 = vmatprep.subr.mxu0 0.0
    %370 = vmatpush1.msra.mxu0 %v240
    %371 = vmatprep.subr.mxu0 0.0
    %372 = vmatpush1.msra.mxu0 %v239
    %373 = vmatprep.subr.mxu0 0.0
    %374 = vmatpush1.msra.mxu0 %v238
    %375 = vmatprep.subr.mxu0 0.0
    %376 = vmatpush2.msra.mxu0 0.0
    %377 = vmatprep.subr.mxu0 0.0
    %378 = vmatpush2.msra.mxu0 0.0
    %379 = vmatprep.subr.mxu0 0.0
    %380 = vmatpush2.msra.mxu0 0.0
    %381 = vmatprep.subr.mxu0 0.0
    %382 = vmatpush2.msra.mxu0 0.0
    %383 = vmatprep.subr.mxu0 0.0
    %384 = vmatpush2.msra.mxu0 0.0
    %385 = vmatprep.subr.mxu0 0.0
    %386 = vmatpush2.msra.mxu0 0.0
    %387 = vmatprep.subr.mxu0 0.0
    %388 = vmatpush2.msra.mxu0 0.0
    %389 = vmatprep.subr.mxu0 0.0
    %390 = vmatpush2.msra.mxu0 0.0
    %391 = vmatprep.subr.mxu0 0.0
    %392 = vmatpush2.msra.mxu0 0.0
    %393 = vmatprep.subr.mxu0 0.0
    %394 = vmatpush2.msra.mxu0 0.0
    %395 = vmatprep.subr.mxu0 0.0
    %396 = vmatpush2.msra.mxu0 0.0
    %397 = vmatprep.subr.mxu0 0.0
    %398 = vmatpush2.msra.mxu0 0.0
    %399 = vmatprep.subr.mxu0 0.0
    %400 = vmatpush2.msra.mxu0 0.0
    %401 = vmatprep.subr.mxu0 0.0
    %402 = vmatpush2.msra.mxu0 0.0
    %403 = vmatprep.subr.mxu0 0.0
    %404 = vmatpush2.msra.mxu0 0.0
    %405 = vmatprep.subr.mxu0 0.0
    %406 = vmatpush2.msra.mxu0 0.0
    %407 = vmatprep.mubr.f32.mxu0 0.0
    %408 = vmatmul.mubr.f32.gmra.mxu0 %v248
    %v409 = vpop.f32.mrf.mxu0
    %v410 = vadd.f32 0.0, %v409
    %v411 = vpop.f32.mrf.mxu0
    %412 = vmatprep.mubr.f32.mxu0 0.0
    %413 = vmatmul.mubr.f32.gmra.mxu0 %v251
    %v414 = vpop.f32.mrf.mxu0
    %v415 = vadd.f32 0.0, %v414
    %v416 = vpop.f32.mrf.mxu0
    %417 = vmatprep.mubr.f32.mxu0 0.0
    %418 = vmatmul.mubr.f32.gmra.mxu0 %v254
    %v419 = vpop.f32.mrf.mxu0
    %v420 = vadd.f32 0.0, %v419
    %v421 = vpop.f32.mrf.mxu0
    %422 = vmatprep.mubr.f32.mxu0 0.0
    %423 = vmatmul.mubr.f32.gmra.mxu0 %v257
    %v424 = vpop.f32.mrf.mxu0
    %v425 = vadd.f32 0.0, %v424
    %v426 = vpop.f32.mrf.mxu0
    %427 = vmatprep.mubr.f32.mxu0 0.0
    %428 = vmatmul.mubr.f32.gmra.mxu0 %v260
    %v429 = vpop.f32.mrf.mxu0
    %v430 = vadd.f32 0.0, %v429
    %v431 = vpop.f32.mrf.mxu0
    %432 = vmatprep.mubr.f32.mxu0 0.0
    %433 = vmatmul.mubr.f32.gmra.mxu0 %v263
    %v434 = vpop.f32.mrf.mxu0
    %v435 = vadd.f32 0.0, %v434
    %v436 = vpop.f32.mrf.mxu0
    %437 = vmatprep.mubr.f32.mxu0 0.0
    %438 = vmatmul.mubr.f32.gmra.mxu0 %v266
    %v439 = vpop.f32.mrf.mxu0
    %v440 = vadd.f32 0.0, %v439
    %v441 = vpop.f32.mrf.mxu0
    %442 = vmatprep.mubr.f32.mxu0 0.0
    %443 = vmatmul.mubr.f32.gmra.mxu0 %v269
    %v444 = vpop.f32.mrf.mxu0
    %v445 = vadd.f32 0.0, %v444
    %v446 = vpop.f32.mrf.mxu0
    %447 = vmatprep.mubr.f32.mxu0 0.0
    %448 = vmatmul.mubr.f32.gmra.mxu0 %v272
    %v449 = vpop.f32.mrf.mxu0
    %v450 = vadd.f32 0.0, %v449
    %v451 = vpop.f32.mrf.mxu0
    %452 = vmatprep.mubr.f32.mxu0 0.0
    %453 = vmatmul.mubr.f32.gmra.mxu0 %v275
    %v454 = vpop.f32.mrf.mxu0
    %v455 = vadd.f32 0.0, %v454
    %v456 = vpop.f32.mrf.mxu0
    %457 = vmatprep.mubr.f32.mxu0 0.0
    %458 = vmatmul.mubr.f32.gmra.mxu0 %v278
    %v459 = vpop.f32.mrf.mxu0
    %v460 = vadd.f32 0.0, %v459
    %v461 = vpop.f32.mrf.mxu0
    %462 = vmatprep.mubr.f32.mxu0 0.0
    %463 = vmatmul.mubr.f32.gmra.mxu0 %v281
    %v464 = vpop.f32.mrf.mxu0
    %v465 = vadd.f32 0.0, %v464
    %v466 = vpop.f32.mrf.mxu0
    %467 = vmatprep.mubr.f32.mxu0 0.0
    %468 = vmatmul.mubr.f32.gmra.mxu0 %v284
    %v469 = vpop.f32.mrf.mxu0
    %v470 = vadd.f32 0.0, %v469
    %v471 = vpop.f32.mrf.mxu0
    %472 = vmatprep.mubr.f32.mxu0 0.0
    %473 = vmatmul.mubr.f32.gmra.mxu0 %v287
    %v474 = vpop.f32.mrf.mxu0
    %v475 = vadd.f32 0.0, %v474
    %v476 = vpop.f32.mrf.mxu0
    %477 = vmatprep.mubr.f32.mxu0 0.0
    %478 = vmatmul.mubr.f32.gmra.mxu0 %v290
    %v479 = vpop.f32.mrf.mxu0
    %v480 = vadd.f32 0.0, %v479
    %v481 = vpop.f32.mrf.mxu0
    %482 = vmatprep.mubr.f32.mxu0 0.0
    %483 = vmatmul.mubr.f32.gmra.mxu0 %v293
    %v484 = vpop.f32.mrf.mxu0
    %v485 = vadd.f32 0.0, %v484
    %v486 = vpop.f32.mrf.mxu0
    %487 = vmatprep.mubr.f32.mxu0 0.0
    %488 = vmatmul.mubr.f32.gmra.mxu0 %v296
    %v489 = vpop.f32.mrf.mxu0
    %v490 = vadd.f32 0.0, %v489
    %v491 = vpop.f32.mrf.mxu0
    %492 = vmatprep.mubr.f32.mxu0 0.0
    %493 = vmatmul.mubr.f32.gmra.mxu0 %v299
    %v494 = vpop.f32.mrf.mxu0
    %v495 = vadd.f32 0.0, %v494
    %v496 = vpop.f32.mrf.mxu0
    %497 = vmatprep.mubr.f32.mxu0 0.0
    %498 = vmatmul.mubr.f32.gmra.mxu0 %v302
    %v499 = vpop.f32.mrf.mxu0
    %v500 = vadd.f32 0.0, %v499
    %v501 = vpop.f32.mrf.mxu0
    %502 = vmatprep.mubr.f32.mxu0 0.0
    %503 = vmatmul.mubr.f32.gmra.mxu0 %v305
    %v504 = vpop.f32.mrf.mxu0
    %v505 = vadd.f32 0.0, %v504
    %v506 = vpop.f32.mrf.mxu0
    %507 = vmatprep.mubr.f32.mxu0 0.0
    %508 = vmatmul.mubr.f32.gmra.mxu0 %v308
    %v509 = vpop.f32.mrf.mxu0
    %v510 = vadd.f32 0.0, %v509
    %v511 = vpop.f32.mrf.mxu0
    %512 = vmatprep.mubr.f32.mxu0 0.0
    %513 = vmatmul.mubr.f32.gmra.mxu0 %v311
    %v514 = vpop.f32.mrf.mxu0
    %v515 = vadd.f32 0.0, %v514
    %v516 = vpop.f32.mrf.mxu0
    %517 = vmatprep.mubr.f32.mxu0 0.0
    %518 = vmatmul.mubr.f32.gmra.mxu0 %v314
    %v519 = vpop.f32.mrf.mxu0
    %v520 = vadd.f32 0.0, %v519
    %v521 = vpop.f32.mrf.mxu0
    %522 = vmatprep.mubr.f32.mxu0 0.0
    %523 = vmatmul.mubr.f32.gmra.mxu0 %v317
    %v524 = vpop.f32.mrf.mxu0
    %v525 = vadd.f32 0.0, %v524
    %v526 = vpop.f32.mrf.mxu0
    %527 = vmatprep.mubr.f32.mxu0 0.0
    %528 = vmatmul.mubr.f32.gmra.mxu0 %v320
    %v529 = vpop.f32.mrf.mxu0
    %v530 = vadd.f32 0.0, %v529
    %v531 = vpop.f32.mrf.mxu0
    %532 = vmatprep.mubr.f32.mxu0 0.0
    %533 = vmatmul.mubr.f32.gmra.mxu0 %v323
    %v534 = vpop.f32.mrf.mxu0
    %v535 = vadd.f32 0.0, %v534
    %v536 = vpop.f32.mrf.mxu0
    %537 = vmatprep.mubr.f32.mxu0 0.0
    %538 = vmatmul.mubr.f32.gmra.mxu0 %v326
    %v539 = vpop.f32.mrf.mxu0
    %v540 = vadd.f32 0.0, %v539
    %v541 = vpop.f32.mrf.mxu0
    %542 = vmatprep.mubr.f32.mxu0 0.0
    %543 = vmatmul.mubr.f32.gmra.mxu0 %v329
    %v544 = vpop.f32.mrf.mxu0
    %v545 = vadd.f32 0.0, %v544
    %v546 = vpop.f32.mrf.mxu0
    %547 = vmatprep.mubr.f32.mxu0 0.0
    %548 = vmatmul.mubr.f32.gmra.mxu0 %v332
    %v549 = vpop.f32.mrf.mxu0
    %v550 = vadd.f32 0.0, %v549
    %v551 = vpop.f32.mrf.mxu0
    %552 = vmatprep.mubr.f32.mxu0 0.0
    %553 = vmatmul.mubr.f32.gmra.mxu0 %v335
    %v554 = vpop.f32.mrf.mxu0
    %v555 = vadd.f32 0.0, %v554
    %v556 = vpop.f32.mrf.mxu0
    %557 = vmatprep.mubr.f32.mxu0 0.0
    %558 = vmatmul.mubr.f32.gmra.mxu0 %v338
    %v559 = vpop.f32.mrf.mxu0
    %v560 = vadd.f32 0.0, %v559
    %v561 = vpop.f32.mrf.mxu0
    %562 = vmatprep.mubr.f32.mxu0 0.0
    %563 = vmatmul.mubr.f32.gmra.mxu0 %v341
    %v564 = vpop.f32.mrf.mxu0
    %v565 = vadd.f32 0.0, %v564
    %v566 = vpop.f32.mrf.mxu0
    %567 = vdwg.mxu0
    %568 = vst [vmem:[#allocation2] sm:$0xff] %v410
    %569 = vst [vmem:[#allocation2 + $0x8] sm:$0xff] %v415
    %570 = vst [vmem:[#allocation2 + $0x10] sm:$0xff] %v420
    %571 = vst [vmem:[#allocation2 + $0x18] sm:$0xff] %v425
    %572 = vst [vmem:[#allocation2 + $0x20] sm:$0xff] %v430
    %573 = vst [vmem:[#allocation2 + $0x28] sm:$0xff] %v435
    %574 = vst [vmem:[#allocation2 + $0x30] sm:$0xff] %v440
    %575 = vst [vmem:[#allocation2 + $0x38] sm:$0xff] %v445
    %576 = vst [vmem:[#allocation2 + $0x40] sm:$0xff] %v450
    %577 = vst [vmem:[#allocation2 + $0x48] sm:$0xff] %v455
    %578 = vst [vmem:[#allocation2 + $0x50] sm:$0xff] %v460
    %579 = vst [vmem:[#allocation2 + $0x58] sm:$0xff] %v465
    %580 = vst [vmem:[#allocation2 + $0x60] sm:$0xff] %v470
    %581 = vst [vmem:[#allocation2 + $0x68] sm:$0xff] %v475
    %582 = vst [vmem:[#allocation2 + $0x70] sm:$0xff] %v480
    %583 = vst [vmem:[#allocation2 + $0x78] sm:$0xff] %v485
    %584 = vst [vmem:[#allocation2 + $0x80] sm:$0xff] %v490
    %585 = vst [vmem:[#allocation2 + $0x88] sm:$0xff] %v495
    %586 = vst [vmem:[#allocation2 + $0x90] sm:$0xff] %v500
    %587 = vst [vmem:[#allocation2 + $0x98] sm:$0xff] %v505
    %588 = vst [vmem:[#allocation2 + $0xa0] sm:$0xff] %v510
    %589 = vst [vmem:[#allocation2 + $0xa8] sm:$0xff] %v515
    %590 = vst [vmem:[#allocation2 + $0xb0] sm:$0xff] %v520
    %591 = vst [vmem:[#allocation2 + $0xb8] sm:$0xff] %v525
    %592 = vst [vmem:[#allocation2 + $0xc0] sm:$0xff] %v530
    %593 = vst [vmem:[#allocation2 + $0xc8] sm:$0xff] %v535
    %594 = vst [vmem:[#allocation2 + $0xd0] sm:$0xff] %v540
    %595 = vst [vmem:[#allocation2 + $0xd8] sm:$0xff] %v545
    %596 = vst [vmem:[#allocation2 + $0xe0] sm:$0xff] %v550
    %597 = vst [vmem:[#allocation2 + $0xe8] sm:$0xff] %v555
    %598 = vst [vmem:[#allocation2 + $0xf0] sm:$0xff] %v560
    %599 = vst [vmem:[#allocation2 + $0xf8] sm:$0xff] %v565
    // Predicated region
    $region10: #{user_embeddings_forward.1} parent=1 // pred_check
      _
    $region11: #{user_embeddings_forward.1} parent=1 // pred_check_branch
      %601 = sbr.rel (0) target = $region13
    $region12: #{user_embeddings_forward.1} parent=1 // pred_region
      %s603 = ssub.s32 4096, 4096
      %604 = vsyncadd [#allocation3], %s603
      %s605 = sshll.u32 [#allocation2], 4
      %s606 = int_to_ptr.vmem [resolvable:$true] %s605
      %611 = dma.vmem_to_hbm [thread:$0]  %s606, 4096, %s2, [#allocation3], 128, 128, 8
    $region13: #{user_embeddings_forward.1} parent=1 // pred_fallthru
      _
    // Predicated region
    $region14: #{user_embeddings_forward.1} parent=1 // pred_check
      _
    $region15: #{user_embeddings_forward.1} parent=1 // pred_check_branch
      %613 = sbr.rel (0) target = $region17
    $region16: #{user_embeddings_forward.1} parent=1 // pred_region
      %614 = dma.done [#allocation3], 4096
    $region17: #{user_embeddings_forward.1} parent=1 // pred_fallthru
      _
    %615 = vsyncpa [#allocation3], 1

</llo_original>
